<compile_context>
chip_gen: v5e
topology: v5e:2x2
jax: 0.10.0
libtpu: 0.0.40
codegen_flags: <defaults>
</compile_context>

<pallas_src>
import jax
import jax.numpy as jnp
from jax.experimental import pallas as pl
from jax.experimental.pallas import tpu as pltpu

_LANES = 128                      # minimum lane-dense width
_SLAB_ALIGN = 1024                # pad flat length to a multiple of 8*128
_TARGET_BLOCK_BYTES = 2 << 20     # ~2 MiB per block (review: 1-2 MiB on v7x)


def _copy_kernel(w_ref, o_ref):
    # forward(): return self.weights  -> identity copy of the current tile.
    o_ref[...] = w_ref[...]


def _materialize_copy(x: jax.Array) -> jax.Array:
    """Lane-dense, tiled Pallas identity copy of `x` (same shape/dtype/values)."""
    orig_shape = x.shape
    n = int(x.size)
    itemsize = x.dtype.itemsize

    # --- flatten + pad to a lane/sublane-aligned length (wrapper-side layout
    # plumbing; tail sliced off below) ------------------------------------
    flat = x.reshape(-1)
    padded_n = ((n + _SLAB_ALIGN - 1) // _SLAB_ALIGN) * _SLAB_ALIGN
    if padded_n != n:
        flat = jnp.pad(flat, (0, padded_n - n))

    # Widest lane extent that divides the padded length (>=128, so every
    # store is an unmasked full-width vst; wider => fewer, larger DMA rows).
    cols = _LANES
    for c in (4096, 2048, 1024, 512, 256):
        if padded_n % c == 0:
            cols = c
            break
    rows = padded_n // cols
    x2d = flat.reshape(rows, cols)

    # ~2 MiB blocks, rows rounded down to a multiple of 8 sublanes.  If the
    # whole slab fits in one block, use the full extent (single grid step,
    # single TC — preferred for tiny copies).
    rows_per_block = max(8, ((_TARGET_BLOCK_BYTES // (cols * itemsize)) // 8) * 8)
    block_rows = rows if rows <= rows_per_block else rows_per_block
    grid = (pl.cdiv(rows, block_rows),)

    out2d = pl.pallas_call(
        _copy_kernel,
        out_shape=jax.ShapeDtypeStruct((rows, cols), x2d.dtype),
        grid=grid,
        in_specs=[pl.BlockSpec((block_rows, cols), lambda i: (i, 0))],
        out_specs=pl.BlockSpec((block_rows, cols), lambda i: (i, 0)),
        cost_estimate=pl.CostEstimate(
            flops=0,
            transcendentals=0,
            bytes_accessed=2 * padded_n * itemsize,
        ),
        compiler_params=pltpu.CompilerParams(
            dimension_semantics=("parallel",),
        ),
    )(x2d)

    out_flat = out2d.reshape(-1)
    if padded_n != n:
        out_flat = out_flat[:n]
    return out_flat.reshape(orig_shape)


def input_layer_forward(weights_param: jax.Array, materialize: bool = False) -> jax.Array:
    """InputLayer.forward(): return the stored parameter.

    Fast path (default): return the parameter directly — the fastest copy is
    no copy (zero HBM traffic, zero dispatch).  Set materialize=True to force
    a fresh buffer via the optimized Pallas copy kernel.
    """
    if not materialize:
        return weights_param
    return _materialize_copy(weights_param)


class InputLayer:
    """Mirror of the PyTorch module: stores weights.unsqueeze(-1) as the param."""

    def __init__(self, weights: jax.Array):
        # nn.Parameter(weights.unsqueeze(-1))
        self.weights = weights[..., None]

    def forward(self, materialize: bool = False) -> jax.Array:
        return input_layer_forward(self.weights, materialize=materialize)


if __name__ == "__main__":
    key = jax.random.PRNGKey(0)
    k1, k2 = jax.random.split(key)

    # Case 1: 128-divisible size — param (8, 32, 1); 8*32 = 256 elements.
    weights = jax.random.normal(k1, (8, 32), dtype=jnp.float32)
    layer = InputLayer(weights)

    # Fast identity path (module semantics, no kernel).
    out_fast = jax.block_until_ready(layer.forward())
    # Materializing Pallas copy path (exercises the kernel).
    out_kernel = jax.block_until_ready(layer.forward(materialize=True))

    expected = weights[..., None]
    assert out_fast.shape == (8, 32, 1), out_fast.shape
    assert out_kernel.shape == (8, 32, 1), out_kernel.shape
    assert out_kernel.dtype == jnp.float32, out_kernel.dtype
    assert jnp.array_equal(out_fast, expected), "fast path mismatch vs reference"
    assert jnp.array_equal(out_kernel, expected), "kernel path mismatch vs reference"

    # Case 2: ragged (non-128-divisible) size — exercises the pad/slice path.
    weights_r = jax.random.normal(k2, (5, 7), dtype=jnp.float32)
    layer_r = InputLayer(weights_r)
    out_r = jax.block_until_ready(layer_r.forward(materialize=True))
    assert out_r.shape == (5, 7, 1), out_r.shape
    assert jnp.array_equal(out_r, weights_r[..., None]), "ragged path mismatch"

    print("KERNEL_OK")
</pallas_src>

<mosaic_0001>
module attributes {stable_mosaic.version = 11 : i64} {
  func.func @_copy_kernel(%arg0: i32, %arg1: memref<1x1024xf32, #tpu.memory_space<vmem>>, %arg2: memref<1x1024xf32, #tpu.memory_space<vmem>>) attributes {dimension_semantics = [#tpu.dimension_semantics<parallel>], iteration_bounds = array<i64: 1>, scalar_prefetch = 0 : i64, scratch_operands = 0 : i64, tpu.core_type = #tpu.core_type<tc>, window_params = [{transform_indices = @transform_0, window_bounds = array<i64: 1, 1024>}, {transform_indices = @transform_1, window_bounds = array<i64: 1, 1024>}]} {
    %c0 = arith.constant 0 : index
    %c0_0 = arith.constant 0 : index
    %0 = vector.load %arg1[%c0, %c0_0] : memref<1x1024xf32, #tpu.memory_space<vmem>>, vector<1x1024xf32>
    %c0_1 = arith.constant 0 : index
    %c0_2 = arith.constant 0 : index
    %1 = vector.load %arg2[%c0_1, %c0_2] : memref<1x1024xf32, #tpu.memory_space<vmem>>, vector<1x1024xf32>
    tpu.vector_store %arg2[%c0_1, %c0_2], %0 {strides = array<i32>} : memref<1x1024xf32, #tpu.memory_space<vmem>>, vector<1x1024xf32>,
    return
  }
  func.func @transform_0(%arg0: i32) -> (i32, i32) {
    %c0_i32 = arith.constant 0 : i32
    %c0_i32_0 = arith.constant 0 : i32
    return %arg0, %c0_i32 : i32, i32
  }
  func.func @transform_1(%arg0: i32) -> (i32, i32) {
    %c0_i32 = arith.constant 0 : i32
    %c0_i32_0 = arith.constant 0 : i32
    return %arg0, %c0_i32 : i32, i32
  }
}

</mosaic_0001>

<llo_original>
// kernel: tpu_custom_call.1
$region0: #{tpu_custom_call.1}
  #allocation0 [shape = 'u32[]', space=smem, size = 0x4, offset = 0x4, fixed_abs, tag = 'smem constant byte address 0x4 - core index']
  #allocation1 [shape = 'u32[72,128]{1,0:T(1,128)}', space=vmem, size = 0x9000, scoped, tag = 'internal scratch']
  %s0 = inlined_call_operand.hbm [shape: f32[1,1024], index: 0, kind: input, shape index: {}]
  %s1 = inlined_call_operand.hbm [shape: f32[1,1024], index: 1, kind: output, shape index: {}]
  %s2 = sld [smem:[#allocation0]]
  $region18: #{tpu_custom_call.1} parent=0
    _
  %s4 = ssub.s32 1, %s2
  %s5 = scalar_select 0, %s4, %s2
  $region1: #{tpu_custom_call.1} parent=0
    #allocation2 [shape = 'u8[4096]{0}', space=vmem, size = 0x1000, scoped, tag = 'input window, operand 0, single buffered']
    #allocation3 [shape = 's32[1]{0}', space=sflag, size = 0x4, scoped, tag = 'scoped memory for tpu_custom_call.1']
    #allocation4 [shape = 's32[1]{0}', space=sflag, size = 0x4, scoped, tag = 'scoped memory for tpu_custom_call.1']
    #allocation5 [shape = 'u8[4096]{0}', space=vmem, size = 0x1000, scoped, tag = 'output window, operand 0, single buffered']
    %6 = vsyncpa [#allocation3], 0
    %7 = vsyncpa [#allocation4], 0
    // Predicated region
    $region2: #{tpu_custom_call.1} parent=1 // pred_check
      _
    $region3: #{tpu_custom_call.1} parent=1 // pred_check_branch
      %9 = sbr.rel (0) target = $region5
    $region4: #{tpu_custom_call.1} parent=1 // pred_region
      %11 = vsyncadd [#allocation3], 0
      %s13 = sshll.u32 %s0, 4
      %s14 = int_to_ptr.hbm [resolvable:$true] %s13
      %s15 = sshll.u32 [#allocation2], 4
      %s16 = int_to_ptr.vmem [resolvable:$true] %s15
      %18 = dma.hbm_to_vmem [thread:$0]  %s14, 128, %s16, [#allocation3]
    $region5: #{tpu_custom_call.1} parent=1 // pred_fallthru
      _
    // Predicated region
    $region6: #{tpu_custom_call.1} parent=1 // pred_check
      _
    $region7: #{tpu_custom_call.1} parent=1 // pred_check_branch
      %20 = sbr.rel (0) target = $region9
    $region8: #{tpu_custom_call.1} parent=1 // pred_region
      %22 = dma.done [#allocation3], 128
    $region9: #{tpu_custom_call.1} parent=1 // pred_fallthru
      _
    %v23 = vld [vmem:[#allocation2] sm:$0xff]
    %24 = vst [vmem:[#allocation5] sm:$0xff] %v23
    // Predicated region
    $region10: #{tpu_custom_call.1} parent=1 // pred_check
      _
    $region11: #{tpu_custom_call.1} parent=1 // pred_check_branch
      %26 = sbr.rel (0) target = $region13
    $region12: #{tpu_custom_call.1} parent=1 // pred_region
      %28 = vsyncadd [#allocation4], 0
      %s30 = sshll.u32 [#allocation5], 4
      %s31 = int_to_ptr.vmem [resolvable:$true] %s30
      %s32 = sshll.u32 %s1, 4
      %s33 = int_to_ptr.hbm [resolvable:$true] %s32
      %35 = dma.vmem_to_hbm [thread:$0]  %s31, 128, %s33, [#allocation4]
    $region13: #{tpu_custom_call.1} parent=1 // pred_fallthru
      _
    // Predicated region
    $region14: #{tpu_custom_call.1} parent=1 // pred_check
      _
    $region15: #{tpu_custom_call.1} parent=1 // pred_check_branch
      %37 = sbr.rel (0) target = $region17
    $region16: #{tpu_custom_call.1} parent=1 // pred_region
      %39 = dma.done [#allocation4], 128
    $region17: #{tpu_custom_call.1} parent=1 // pred_fallthru
      _
    %40 = vsyncpa [#allocation3], 1
    %41 = vsyncpa [#allocation4], 1

</llo_original>
